<compile_context>
chip_gen: v5e
topology: v5e:2x2
jax: 0.10.0
libtpu: 0.0.40
codegen_flags: <defaults>
</compile_context>

<pallas_src>
import jax
import jax.numpy as jnp
from jax.experimental import pallas as pl
from jax.experimental.pallas import tpu as pltpu


def vdm_kernel(x_ref, w1_ref, b1_ref, w2_ref, b2_ref,
               w3_ref, b3_ref, w4_ref, b4_ref, out_ref):
    # x_ref: (TM, input_dim) f32 tile; w*: bf16; b*: f32 (1, N); out: f32 (TM, out_dim).
    h = x_ref[...].astype(jnp.bfloat16)          # in-kernel cast rides an idle VPU slot

    h = jnp.dot(h, w1_ref[...], preferred_element_type=jnp.float32) + b1_ref[...]
    h = jnp.maximum(h, 0.0).astype(jnp.bfloat16)

    h = jnp.dot(h, w2_ref[...], preferred_element_type=jnp.float32) + b2_ref[...]
    h = jnp.maximum(h, 0.0).astype(jnp.bfloat16)

    h = jnp.dot(h, w3_ref[...], preferred_element_type=jnp.float32) + b3_ref[...]
    h = jnp.maximum(h, 0.0).astype(jnp.bfloat16)

    y = jnp.dot(h, w4_ref[...], preferred_element_type=jnp.float32) + b4_ref[...]
    out_ref[...] = y.astype(out_ref.dtype)


def _round_up(x, m):
    return ((x + m - 1) // m) * m


def _pick_tile(batch, tm_target):
    """Batch tile size: single tile for small batches, else a 128-multiple that gives
    at least 2 grid steps (so the 'parallel' axis shards across v7x's 2 TensorCores)."""
    b8 = _round_up(max(batch, 1), 8)
    if b8 <= 256:
        return b8
    half = _round_up(pl.cdiv(b8, 2), 128)
    return min(tm_target, half)


def vdm_forward(x, params, *, tm_target=1024):
    """x: [B, input_dim] float32. params: dict of (w, b), w pre-transposed [in, out], f32."""
    w1, b1 = params["fc1"]
    w2, b2 = params["fc2"]
    w3, b3 = params["fc3"]
    w4, b4 = params["fc4"]

    B, in_dim = x.shape
    out_dim = w4.shape[1]

    TM = _pick_tile(B, tm_target)
    B_pad = _round_up(B, TM)
    if B_pad != B:
        x = jnp.pad(x, ((0, B_pad - B), (0, 0)))   # padded rows discarded below

    # Weights cast to bf16 once (tiny arrays); biases stay f32 for the f32 accum path.
    w1b, w2b, w3b, w4b = (w.astype(jnp.bfloat16) for w in (w1, w2, w3, w4))

    grid = (B_pad // TM,)
    resident = lambda a: pl.BlockSpec(a.shape, lambda i: (0, 0))  # grid-invariant block

    out = pl.pallas_call(
        vdm_kernel,
        out_shape=jax.ShapeDtypeStruct((B_pad, out_dim), jnp.float32),
        grid=grid,
        in_specs=[pl.BlockSpec((TM, in_dim), lambda i: (i, 0)),
                  resident(w1b), resident(b1),
                  resident(w2b), resident(b2),
                  resident(w3b), resident(b3),
                  resident(w4b), resident(b4)],
        out_specs=pl.BlockSpec((TM, out_dim), lambda i: (i, 0)),
        compiler_params=pltpu.CompilerParams(
            dimension_semantics=("parallel",)),
    )(x, w1b, b1, w2b, b2, w3b, b3, w4b, b4)

    return out if B_pad == B else out[:B]


def init_linear(key, in_dim, out_dim):
    """Mimics PyTorch nn.Linear default init U[-1/sqrt(in), 1/sqrt(in)].
    Weight returned pre-transposed as [in_dim, out_dim]."""
    kw, kb = jax.random.split(key)
    bound = 1.0 / (in_dim ** 0.5)
    w = jax.random.uniform(kw, (in_dim, out_dim), jnp.float32, -bound, bound)
    b = jax.random.uniform(kb, (1, out_dim), jnp.float32, -bound, bound)
    return w, b


def make_params(key, input_dim, hidden_dim, output_dim):
    k1, k2, k3, k4 = jax.random.split(key, 4)
    return {
        "fc1": init_linear(k1, input_dim, hidden_dim),
        "fc2": init_linear(k2, hidden_dim, hidden_dim),
        "fc3": init_linear(k3, hidden_dim, hidden_dim),
        "fc4": init_linear(k4, hidden_dim, output_dim),
    }


def vdm_reference(x, params):
    """Pure-JAX f32 reference for validation."""
    w1, b1 = params["fc1"]
    w2, b2 = params["fc2"]
    w3, b3 = params["fc3"]
    w4, b4 = params["fc4"]
    h = jax.nn.relu(x @ w1 + b1)
    h = jax.nn.relu(h @ w2 + b2)
    h = jax.nn.relu(h @ w3 + b3)
    return h @ w4 + b4


if __name__ == "__main__":
    input_dim, hidden_dim, output_dim = 32, 128, 16

    key = jax.random.PRNGKey(0)
    kx, kp = jax.random.split(key)
    params = make_params(kp, input_dim, hidden_dim, output_dim)

    # Small batch (single tile) and a batch that exercises the 2-step parallel grid.
    for batch in (8, 512):
        x = jax.random.normal(jax.random.fold_in(kx, batch),
                              (batch, input_dim), jnp.float32)
        out = jax.block_until_ready(vdm_forward(x, params))
        ref = vdm_reference(x, params)
        assert out.shape == (batch, output_dim)
        # bf16 MXU operands with f32 accumulation vs pure-f32 reference.
        assert jnp.allclose(out, ref, atol=5e-2, rtol=5e-2), \
            float(jnp.max(jnp.abs(out - ref)))

    print("KERNEL_OK")
</pallas_src>

<mosaic_0001>
module attributes {stable_mosaic.version = 11 : i64} {
  func.func @vdm_kernel(%arg0: i32, %arg1: memref<8x32xf32, #tpu.memory_space<vmem>>, %arg2: memref<32x128xbf16, #tpu.memory_space<vmem>>, %arg3: memref<1x128xf32, #tpu.memory_space<vmem>>, %arg4: memref<128x128xbf16, #tpu.memory_space<vmem>>, %arg5: memref<1x128xf32, #tpu.memory_space<vmem>>, %arg6: memref<128x128xbf16, #tpu.memory_space<vmem>>, %arg7: memref<1x128xf32, #tpu.memory_space<vmem>>, %arg8: memref<128x16xbf16, #tpu.memory_space<vmem>>, %arg9: memref<1x16xf32, #tpu.memory_space<vmem>>, %arg10: memref<8x16xf32, #tpu.memory_space<vmem>>) attributes {dimension_semantics = [#tpu.dimension_semantics<parallel>], iteration_bounds = array<i64: 1>, scalar_prefetch = 0 : i64, scratch_operands = 0 : i64, tpu.core_type = #tpu.core_type<tc>, window_params = [{transform_indices = @transform_0, window_bounds = array<i64: 8, 32>}, {pipeline_mode = #tpu.pipeline_mode<synchronous>, transform_indices = @transform_1, window_bounds = array<i64: 32, 128>}, {pipeline_mode = #tpu.pipeline_mode<synchronous>, transform_indices = @transform_2, window_bounds = array<i64: 1, 128>}, {pipeline_mode = #tpu.pipeline_mode<synchronous>, transform_indices = @transform_3, window_bounds = array<i64: 128, 128>}, {pipeline_mode = #tpu.pipeline_mode<synchronous>, transform_indices = @transform_4, window_bounds = array<i64: 1, 128>}, {pipeline_mode = #tpu.pipeline_mode<synchronous>, transform_indices = @transform_5, window_bounds = array<i64: 128, 128>}, {pipeline_mode = #tpu.pipeline_mode<synchronous>, transform_indices = @transform_6, window_bounds = array<i64: 1, 128>}, {pipeline_mode = #tpu.pipeline_mode<synchronous>, transform_indices = @transform_7, window_bounds = array<i64: 128, 16>}, {pipeline_mode = #tpu.pipeline_mode<synchronous>, transform_indices = @transform_8, window_bounds = array<i64: 1, 16>}, {transform_indices = @transform_9, window_bounds = array<i64: 8, 16>}]} {
    %c0 = arith.constant 0 : index
    %c0_0 = arith.constant 0 : index
    %0 = vector.load %arg1[%c0, %c0_0] : memref<8x32xf32, #tpu.memory_space<vmem>>, vector<8x32xf32>
    %1 = arith.truncf %0 : vector<8x32xf32> to vector<8x32xbf16>
    %c0_1 = arith.constant 0 : index
    %c0_2 = arith.constant 0 : index
    %2 = vector.load %arg2[%c0_1, %c0_2] : memref<32x128xbf16, #tpu.memory_space<vmem>>, vector<32x128xbf16>
    %cst = arith.constant dense<0.000000e+00> : vector<8x128xf32>
    %3 = tpu.matmul %1, %2, %cst {dimension_numbers = #tpu.dot_dimension_numbers<[1], [0], [0], [1], [0, 0, 1, 1], [], []>} : vector<8x32xbf16>, vector<32x128xbf16>, vector<8x128xf32> -> vector<8x128xf32>
    %c0_3 = arith.constant 0 : index
    %c0_4 = arith.constant 0 : index
    %4 = vector.load %arg3[%c0_3, %c0_4] : memref<1x128xf32, #tpu.memory_space<vmem>>, vector<1x128xf32>
    %5 = vector.broadcast %4 : vector<1x128xf32> to vector<8x128xf32>
    %6 = arith.addf %3, %5 : vector<8x128xf32>
    %cst_5 = arith.constant 0.000000e+00 : f32
    %7 = vector.broadcast %cst_5 : f32 to vector<8x128xf32>
    %8 = arith.maximumf %6, %7 : vector<8x128xf32>
    %9 = arith.truncf %8 : vector<8x128xf32> to vector<8x128xbf16>
    %c0_6 = arith.constant 0 : index
    %c0_7 = arith.constant 0 : index
    %10 = vector.load %arg4[%c0_6, %c0_7] : memref<128x128xbf16, #tpu.memory_space<vmem>>, vector<128x128xbf16>
    %cst_8 = arith.constant dense<0.000000e+00> : vector<8x128xf32>
    %11 = tpu.matmul %9, %10, %cst_8 {dimension_numbers = #tpu.dot_dimension_numbers<[1], [0], [0], [1], [0, 0, 1, 1], [], []>} : vector<8x128xbf16>, vector<128x128xbf16>, vector<8x128xf32> -> vector<8x128xf32>
    %c0_9 = arith.constant 0 : index
    %c0_10 = arith.constant 0 : index
    %12 = vector.load %arg5[%c0_9, %c0_10] : memref<1x128xf32, #tpu.memory_space<vmem>>, vector<1x128xf32>
    %13 = vector.broadcast %12 : vector<1x128xf32> to vector<8x128xf32>
    %14 = arith.addf %11, %13 : vector<8x128xf32>
    %cst_11 = arith.constant 0.000000e+00 : f32
    %15 = vector.broadcast %cst_11 : f32 to vector<8x128xf32>
    %16 = arith.maximumf %14, %15 : vector<8x128xf32>
    %17 = arith.truncf %16 : vector<8x128xf32> to vector<8x128xbf16>
    %c0_12 = arith.constant 0 : index
    %c0_13 = arith.constant 0 : index
    %18 = vector.load %arg6[%c0_12, %c0_13] : memref<128x128xbf16, #tpu.memory_space<vmem>>, vector<128x128xbf16>
    %cst_14 = arith.constant dense<0.000000e+00> : vector<8x128xf32>
    %19 = tpu.matmul %17, %18, %cst_14 {dimension_numbers = #tpu.dot_dimension_numbers<[1], [0], [0], [1], [0, 0, 1, 1], [], []>} : vector<8x128xbf16>, vector<128x128xbf16>, vector<8x128xf32> -> vector<8x128xf32>
    %c0_15 = arith.constant 0 : index
    %c0_16 = arith.constant 0 : index
    %20 = vector.load %arg7[%c0_15, %c0_16] : memref<1x128xf32, #tpu.memory_space<vmem>>, vector<1x128xf32>
    %21 = vector.broadcast %20 : vector<1x128xf32> to vector<8x128xf32>
    %22 = arith.addf %19, %21 : vector<8x128xf32>
    %cst_17 = arith.constant 0.000000e+00 : f32
    %23 = vector.broadcast %cst_17 : f32 to vector<8x128xf32>
    %24 = arith.maximumf %22, %23 : vector<8x128xf32>
    %25 = arith.truncf %24 : vector<8x128xf32> to vector<8x128xbf16>
    %c0_18 = arith.constant 0 : index
    %c0_19 = arith.constant 0 : index
    %26 = vector.load %arg8[%c0_18, %c0_19] : memref<128x16xbf16, #tpu.memory_space<vmem>>, vector<128x16xbf16>
    %cst_20 = arith.constant dense<0.000000e+00> : vector<8x16xf32>
    %27 = tpu.matmul %25, %26, %cst_20 {dimension_numbers = #tpu.dot_dimension_numbers<[1], [0], [0], [1], [0, 0, 1, 1], [], []>} : vector<8x128xbf16>, vector<128x16xbf16>, vector<8x16xf32> -> vector<8x16xf32>
    %c0_21 = arith.constant 0 : index
    %c0_22 = arith.constant 0 : index
    %28 = vector.load %arg9[%c0_21, %c0_22] : memref<1x16xf32, #tpu.memory_space<vmem>>, vector<1x16xf32>
    %29 = vector.broadcast %28 : vector<1x16xf32> to vector<8x16xf32>
    %30 = arith.addf %27, %29 : vector<8x16xf32>
    %c0_23 = arith.constant 0 : index
    %c0_24 = arith.constant 0 : index
    %31 = vector.load %arg10[%c0_23, %c0_24] : memref<8x16xf32, #tpu.memory_space<vmem>>, vector<8x16xf32>
    tpu.vector_store %arg10[%c0_23, %c0_24], %30 {strides = array<i32>} : memref<8x16xf32, #tpu.memory_space<vmem>>, vector<8x16xf32>,
    return
  }
  func.func @transform_0(%arg0: i32) -> (i32, i32) {
    %c0_i32 = arith.constant 0 : i32
    %c0_i32_0 = arith.constant 0 : i32
    return %arg0, %c0_i32 : i32, i32
  }
  func.func @transform_1(%arg0: i32) -> (i32, i32) {
    %c0_i32 = arith.constant 0 : i32
    %c0_i32_0 = arith.constant 0 : i32
    %c0_i32_1 = arith.constant 0 : i32
    return %c0_i32, %c0_i32_0 : i32, i32
  }
  func.func @transform_2(%arg0: i32) -> (i32, i32) {
    %c0_i32 = arith.constant 0 : i32
    %c0_i32_0 = arith.constant 0 : i32
    %c0_i32_1 = arith.constant 0 : i32
    return %c0_i32, %c0_i32_0 : i32, i32
  }
  func.func @transform_3(%arg0: i32) -> (i32, i32) {
    %c0_i32 = arith.constant 0 : i32
    %c0_i32_0 = arith.constant 0 : i32
    %c0_i32_1 = arith.constant 0 : i32
    return %c0_i32, %c0_i32_0 : i32, i32
  }
  func.func @transform_4(%arg0: i32) -> (i32, i32) {
    %c0_i32 = arith.constant 0 : i32
    %c0_i32_0 = arith.constant 0 : i32
    %c0_i32_1 = arith.constant 0 : i32
    return %c0_i32, %c0_i32_0 : i32, i32
  }
  func.func @transform_5(%arg0: i32) -> (i32, i32) {
    %c0_i32 = arith.constant 0 : i32
    %c0_i32_0 = arith.constant 0 : i32
    %c0_i32_1 = arith.constant 0 : i32
    return %c0_i32, %c0_i32_0 : i32, i32
  }
  func.func @transform_6(%arg0: i32) -> (i32, i32) {
    %c0_i32 = arith.constant 0 : i32
    %c0_i32_0 = arith.constant 0 : i32
    %c0_i32_1 = arith.constant 0 : i32
    return %c0_i32, %c0_i32_0 : i32, i32
  }
  func.func @transform_7(%arg0: i32) -> (i32, i32) {
    %c0_i32 = arith.constant 0 : i32
    %c0_i32_0 = arith.constant 0 : i32
    %c0_i32_1 = arith.constant 0 : i32
    return %c0_i32, %c0_i32_0 : i32, i32
  }
  func.func @transform_8(%arg0: i32) -> (i32, i32) {
    %c0_i32 = arith.constant 0 : i32
    %c0_i32_0 = arith.constant 0 : i32
    %c0_i32_1 = arith.constant 0 : i32
    return %c0_i32, %c0_i32_0 : i32, i32
  }
  func.func @transform_9(%arg0: i32) -> (i32, i32) {
    %c0_i32 = arith.constant 0 : i32
    %c0_i32_0 = arith.constant 0 : i32
    return %arg0, %c0_i32 : i32, i32
  }
}

</mosaic_0001>

<llo_original>
// kernel: tpu_custom_call.1
$region0: #{tpu_custom_call.1}
  #allocation0 [shape = 'u32[]', space=smem, size = 0x4, offset = 0x4, fixed_abs, tag = 'smem constant byte address 0x4 - core index']
  #allocation1 [shape = 'u32[72,128]{1,0:T(1,128)}', space=vmem, size = 0x9000, scoped, tag = 'internal scratch']
  %s0 = inlined_call_operand.vmem [shape: f32[8,32], index: 0, kind: input, shape index: {}]
  %s1 = inlined_call_operand.hbm [shape: bf16[32,128], index: 1, kind: input, shape index: {}]
  %s2 = inlined_call_operand.vmem [shape: f32[1,128], index: 2, kind: input, shape index: {}]
  %s3 = inlined_call_operand.vmem [shape: bf16[128,128], index: 3, kind: input, shape index: {}]
  %s4 = inlined_call_operand.vmem [shape: f32[1,128], index: 4, kind: input, shape index: {}]
  %s5 = inlined_call_operand.hbm [shape: bf16[128,128], index: 5, kind: input, shape index: {}]
  %s6 = inlined_call_operand.vmem [shape: f32[1,128], index: 6, kind: input, shape index: {}]
  %s7 = inlined_call_operand.vmem [shape: bf16[128,16], index: 7, kind: input, shape index: {}]
  %s8 = inlined_call_operand.vmem [shape: f32[1,16], index: 8, kind: input, shape index: {}]
  %s9 = inlined_call_operand.hbm [shape: f32[8,16], index: 9, kind: output, shape index: {}]
  %s10 = sld [smem:[#allocation0]]
  $region54: #{tpu_custom_call.1} parent=0
    _
  %s12 = ssub.s32 1, %s10
  %s13 = scalar_select 0, %s12, %s10
  $region1: #{tpu_custom_call.1} parent=0
    #allocation2 [shape = 'u8[8192]{0}', space=vmem, size = 0x2000, scoped, tag = 'input window, operand 1, single buffered']
    #allocation3 [shape = 's32[1]{0}', space=sflag, size = 0x4, scoped, tag = 'scoped memory for tpu_custom_call.1']
    #allocation4 [shape = 's32[1]{0}', space=sflag, size = 0x4, scoped, tag = 'scoped memory for tpu_custom_call.1']
    #allocation5 [shape = 'u8[32768]{0}', space=vmem, size = 0x8000, scoped, tag = 'input window, operand 5, single buffered']
    #allocation6 [shape = 's32[1]{0}', space=sflag, size = 0x4, scoped, tag = 'scoped memory for tpu_custom_call.1']
    #allocation7 [shape = 'u8[4096]{0}', space=vmem, size = 0x1000, scoped, tag = 'output window, operand 0, single buffered']
    %14 = vsyncpa [#allocation3], 0
    %15 = vsyncpa [#allocation6], 0
    %16 = vsyncpa [#allocation4], 0
    // Predicated region
    $region2: #{tpu_custom_call.1} parent=1 // pred_check
      _
    $region3: #{tpu_custom_call.1} parent=1 // pred_check_branch
      %18 = sbr.rel (0) target = $region5
    $region4: #{tpu_custom_call.1} parent=1 // pred_region
      _
    $region5: #{tpu_custom_call.1} parent=1 // pred_fallthru
      _
    // Predicated region
    $region6: #{tpu_custom_call.1} parent=1 // pred_check
      _
    $region7: #{tpu_custom_call.1} parent=1 // pred_check_branch
      %20 = sbr.rel (0) target = $region9
    $region8: #{tpu_custom_call.1} parent=1 // pred_region
      %22 = vsyncadd [#allocation3], 0
      %s23 = sshll.u32 %s1, 4
      %s24 = int_to_ptr.hbm [resolvable:$true] %s23
      %s25 = sshll.u32 [#allocation2], 4
      %s26 = int_to_ptr.vmem [resolvable:$true] %s25
      %31 = dma.hbm_to_vmem [thread:$0]  %s24, 256, %s26, [#allocation3], 64, 64, 4
    $region9: #{tpu_custom_call.1} parent=1 // pred_fallthru
      _
    // Predicated region
    $region10: #{tpu_custom_call.1} parent=1 // pred_check
      _
    $region11: #{tpu_custom_call.1} parent=1 // pred_check_branch
      %33 = sbr.rel (0) target = $region13
    $region12: #{tpu_custom_call.1} parent=1 // pred_region
      _
    $region13: #{tpu_custom_call.1} parent=1 // pred_fallthru
      _
    // Predicated region
    $region14: #{tpu_custom_call.1} parent=1 // pred_check
      _
    $region15: #{tpu_custom_call.1} parent=1 // pred_check_branch
      %35 = sbr.rel (0) target = $region17
    $region16: #{tpu_custom_call.1} parent=1 // pred_region
      _
    $region17: #{tpu_custom_call.1} parent=1 // pred_fallthru
      _
    // Predicated region
    $region18: #{tpu_custom_call.1} parent=1 // pred_check
      _
    $region19: #{tpu_custom_call.1} parent=1 // pred_check_branch
      %37 = sbr.rel (0) target = $region21
    $region20: #{tpu_custom_call.1} parent=1 // pred_region
      _
    $region21: #{tpu_custom_call.1} parent=1 // pred_fallthru
      _
    // Predicated region
    $region22: #{tpu_custom_call.1} parent=1 // pred_check
      _
    $region23: #{tpu_custom_call.1} parent=1 // pred_check_branch
      %39 = sbr.rel (0) target = $region25
    $region24: #{tpu_custom_call.1} parent=1 // pred_region
      %41 = vsyncadd [#allocation6], 0
      %s42 = sshll.u32 %s5, 4
      %s43 = int_to_ptr.hbm [resolvable:$true] %s42
      %s44 = sshll.u32 [#allocation5], 4
      %s45 = int_to_ptr.vmem [resolvable:$true] %s44
      %50 = dma.hbm_to_vmem [thread:$0]  %s43, 1024, %s45, [#allocation6], 64, 64, 4
    $region25: #{tpu_custom_call.1} parent=1 // pred_fallthru
      _
    // Predicated region
    $region26: #{tpu_custom_call.1} parent=1 // pred_check
      _
    $region27: #{tpu_custom_call.1} parent=1 // pred_check_branch
      %52 = sbr.rel (0) target = $region29
    $region28: #{tpu_custom_call.1} parent=1 // pred_region
      _
    $region29: #{tpu_custom_call.1} parent=1 // pred_fallthru
      _
    // Predicated region
    $region30: #{tpu_custom_call.1} parent=1 // pred_check
      _
    $region31: #{tpu_custom_call.1} parent=1 // pred_check_branch
      %54 = sbr.rel (0) target = $region33
    $region32: #{tpu_custom_call.1} parent=1 // pred_region
      _
    $region33: #{tpu_custom_call.1} parent=1 // pred_fallthru
      _
    // Predicated region
    $region34: #{tpu_custom_call.1} parent=1 // pred_check
      _
    $region35: #{tpu_custom_call.1} parent=1 // pred_check_branch
      %56 = sbr.rel (0) target = $region37
    $region36: #{tpu_custom_call.1} parent=1 // pred_region
      _
    $region37: #{tpu_custom_call.1} parent=1 // pred_fallthru
      _
    // Predicated region
    $region38: #{tpu_custom_call.1} parent=1 // pred_check
      _
    $region39: #{tpu_custom_call.1} parent=1 // pred_check_branch
      %58 = sbr.rel (0) target = $region41
    $region40: #{tpu_custom_call.1} parent=1 // pred_region
      %60 = dma.done [#allocation3], 256
    $region41: #{tpu_custom_call.1} parent=1 // pred_fallthru
      _
    // Predicated region
    $region42: #{tpu_custom_call.1} parent=1 // pred_check
      _
    $region43: #{tpu_custom_call.1} parent=1 // pred_check_branch
      %62 = sbr.rel (0) target = $region45
    $region44: #{tpu_custom_call.1} parent=1 // pred_region
      %64 = dma.done [#allocation6], 1024
    $region45: #{tpu_custom_call.1} parent=1 // pred_fallthru
      _
    %v66 = vld [vmem:[%s0] sm:$0xff]
    %v67 = vpack.c.bf16 %v66, %v66
    %v68 = vld [vmem:[#allocation2] sm:$0xf]
    %v69 = vld [vmem:[#allocation2 + $0x4] sm:$0xf]
    %v70 = vld [vmem:[#allocation2 + $0x8] sm:$0xf]
    %v71 = vld [vmem:[#allocation2 + $0xc] sm:$0xf]
    %v72 = vld [vmem:[%s2] sm:$0x1]
    %v74 = vperm.slane %v72, 0
    %v80 = vunpack.c.l.b16 %v68
    %v81 = vunpack.c.l.b16 %v69
    %v82 = vunpack.c.l.b16 %v70
    %v83 = vunpack.c.l.b16 %v71
    %v84 = vpack.c.b16 %v81, %v80
    %v85 = vpack.c.b16 %v83, %v82
    %vm88 = vcmask 261120
    %v90 = vsel %vm88, %v67, 0
    %92 = vmatpush.bf16.msra.mxu0 0
    %93 = vmatpush.bf16.msra.mxu0 0
    %94 = vmatpush.bf16.msra.mxu0 0
    %95 = vmatpush.bf16.msra.mxu0 0
    %96 = vmatpush.bf16.msra.mxu0 0
    %97 = vmatpush.bf16.msra.mxu0 0
    %98 = vmatpush.bf16.msra.mxu0 %v85
    %99 = vmatpush.bf16.msra.mxu0 %v84
    %100 = vmatmul.bf16.gmra.mxu0 %v90
    %v101 = vpop.f32.mrf.mxu0
    %v102 = vadd.f32 %v74, %v101
    %v103 = vpop.f32.mrf.mxu0
    %104 = vdwg.mxu0
    %v105 = vmax.f32 %v102, 0.0
    %v106 = vpack.c.bf16 %v105, %v105
    %v107 = vld [vmem:[%s3] sm:$0xf]
    %v108 = vld [vmem:[%s3 + $0x4] sm:$0xf]
    %v109 = vld [vmem:[%s3 + $0x8] sm:$0xf]
    %v110 = vld [vmem:[%s3 + $0xc] sm:$0xf]
    %v111 = vld [vmem:[%s3 + $0x10] sm:$0xf]
    %v112 = vld [vmem:[%s3 + $0x14] sm:$0xf]
    %v113 = vld [vmem:[%s3 + $0x18] sm:$0xf]
    %v114 = vld [vmem:[%s3 + $0x1c] sm:$0xf]
    %v115 = vld [vmem:[%s3 + $0x20] sm:$0xf]
    %v116 = vld [vmem:[%s3 + $0x24] sm:$0xf]
    %v117 = vld [vmem:[%s3 + $0x28] sm:$0xf]
    %v118 = vld [vmem:[%s3 + $0x2c] sm:$0xf]
    %v119 = vld [vmem:[%s3 + $0x30] sm:$0xf]
    %v120 = vld [vmem:[%s3 + $0x34] sm:$0xf]
    %v121 = vld [vmem:[%s3 + $0x38] sm:$0xf]
    %v122 = vld [vmem:[%s3 + $0x3c] sm:$0xf]
    %v123 = vld [vmem:[%s4] sm:$0x1]
    %v125 = vperm.slane %v123, 0
    %v143 = vunpack.c.l.b16 %v107
    %v144 = vunpack.c.l.b16 %v108
    %v145 = vunpack.c.l.b16 %v109
    %v146 = vunpack.c.l.b16 %v110
    %v147 = vunpack.c.l.b16 %v111
    %v148 = vunpack.c.l.b16 %v112
    %v149 = vunpack.c.l.b16 %v113
    %v150 = vunpack.c.l.b16 %v114
    %v151 = vunpack.c.l.b16 %v115
    %v152 = vunpack.c.l.b16 %v116
    %v153 = vunpack.c.l.b16 %v117
    %v154 = vunpack.c.l.b16 %v118
    %v155 = vunpack.c.l.b16 %v119
    %v156 = vunpack.c.l.b16 %v120
    %v157 = vunpack.c.l.b16 %v121
    %v158 = vunpack.c.l.b16 %v122
    %v159 = vpack.c.b16 %v144, %v143
    %v160 = vpack.c.b16 %v146, %v145
    %v161 = vpack.c.b16 %v148, %v147
    %v162 = vpack.c.b16 %v150, %v149
    %v163 = vpack.c.b16 %v152, %v151
    %v164 = vpack.c.b16 %v154, %v153
    %v165 = vpack.c.b16 %v156, %v155
    %v166 = vpack.c.b16 %v158, %v157
    %175 = vmatpush.bf16.msra.mxu0 %v166
    %176 = vmatpush.bf16.msra.mxu0 %v165
    %177 = vmatpush.bf16.msra.mxu0 %v164
    %178 = vmatpush.bf16.msra.mxu0 %v163
    %179 = vmatpush.bf16.msra.mxu0 %v162
    %180 = vmatpush.bf16.msra.mxu0 %v161
    %181 = vmatpush.bf16.msra.mxu0 %v160
    %182 = vmatpush.bf16.msra.mxu0 %v159
    %183 = vmatmul.bf16.gmra.mxu0 %v106
    %v184 = vpop.f32.mrf.mxu0
    %v185 = vadd.f32 %v125, %v184
    %v186 = vpop.f32.mrf.mxu0
    %187 = vdwg.mxu0
    %v188 = vmax.f32 %v185, 0.0
    %v189 = vpack.c.bf16 %v188, %v188
    %v190 = vld [vmem:[#allocation5] sm:$0xf]
    %v191 = vld [vmem:[#allocation5 + $0x4] sm:$0xf]
    %v192 = vld [vmem:[#allocation5 + $0x8] sm:$0xf]
    %v193 = vld [vmem:[#allocation5 + $0xc] sm:$0xf]
    %v194 = vld [vmem:[#allocation5 + $0x10] sm:$0xf]
    %v195 = vld [vmem:[#allocation5 + $0x14] sm:$0xf]
    %v196 = vld [vmem:[#allocation5 + $0x18] sm:$0xf]
    %v197 = vld [vmem:[#allocation5 + $0x1c] sm:$0xf]
    %v198 = vld [vmem:[#allocation5 + $0x20] sm:$0xf]
    %v199 = vld [vmem:[#allocation5 + $0x24] sm:$0xf]
    %v200 = vld [vmem:[#allocation5 + $0x28] sm:$0xf]
    %v201 = vld [vmem:[#allocation5 + $0x2c] sm:$0xf]
    %v202 = vld [vmem:[#allocation5 + $0x30] sm:$0xf]
    %v203 = vld [vmem:[#allocation5 + $0x34] sm:$0xf]
    %v204 = vld [vmem:[#allocation5 + $0x38] sm:$0xf]
    %v205 = vld [vmem:[#allocation5 + $0x3c] sm:$0xf]
    %v206 = vld [vmem:[%s6] sm:$0x1]
    %v208 = vperm.slane %v206, 0
    %v226 = vunpack.c.l.b16 %v190
    %v227 = vunpack.c.l.b16 %v191
    %v228 = vunpack.c.l.b16 %v192
    %v229 = vunpack.c.l.b16 %v193
    %v230 = vunpack.c.l.b16 %v194
    %v231 = vunpack.c.l.b16 %v195
    %v232 = vunpack.c.l.b16 %v196
    %v233 = vunpack.c.l.b16 %v197
    %v234 = vunpack.c.l.b16 %v198
    %v235 = vunpack.c.l.b16 %v199
    %v236 = vunpack.c.l.b16 %v200
    %v237 = vunpack.c.l.b16 %v201
    %v238 = vunpack.c.l.b16 %v202
    %v239 = vunpack.c.l.b16 %v203
    %v240 = vunpack.c.l.b16 %v204
    %v241 = vunpack.c.l.b16 %v205
    %v242 = vpack.c.b16 %v227, %v226
    %v243 = vpack.c.b16 %v229, %v228
    %v244 = vpack.c.b16 %v231, %v230
    %v245 = vpack.c.b16 %v233, %v232
    %v246 = vpack.c.b16 %v235, %v234
    %v247 = vpack.c.b16 %v237, %v236
    %v248 = vpack.c.b16 %v239, %v238
    %v249 = vpack.c.b16 %v241, %v240
    %258 = vmatpush.bf16.msra.mxu0 %v249
    %259 = vmatpush.bf16.msra.mxu0 %v248
    %260 = vmatpush.bf16.msra.mxu0 %v247
    %261 = vmatpush.bf16.msra.mxu0 %v246
    %262 = vmatpush.bf16.msra.mxu0 %v245
    %263 = vmatpush.bf16.msra.mxu0 %v244
    %264 = vmatpush.bf16.msra.mxu0 %v243
    %265 = vmatpush.bf16.msra.mxu0 %v242
    %266 = vmatmul.bf16.gmra.mxu0 %v189
    %v267 = vpop.f32.mrf.mxu0
    %v268 = vadd.f32 %v208, %v267
    %v269 = vpop.f32.mrf.mxu0
    %270 = vdwg.mxu0
    %v271 = vmax.f32 %v268, 0.0
    %v272 = vpack.c.bf16 %v271, %v271
    %v273 = vld [vmem:[%s7] sm:$0xf]
    %v274 = vld [vmem:[%s7 + $0x4] sm:$0xf]
    %v275 = vld [vmem:[%s7 + $0x8] sm:$0xf]
    %v276 = vld [vmem:[%s7 + $0xc] sm:$0xf]
    %v277 = vld [vmem:[%s7 + $0x10] sm:$0xf]
    %v278 = vld [vmem:[%s7 + $0x14] sm:$0xf]
    %v279 = vld [vmem:[%s7 + $0x18] sm:$0xf]
    %v280 = vld [vmem:[%s7 + $0x1c] sm:$0xf]
    %v281 = vld [vmem:[%s7 + $0x20] sm:$0xf]
    %v282 = vld [vmem:[%s7 + $0x24] sm:$0xf]
    %v283 = vld [vmem:[%s7 + $0x28] sm:$0xf]
    %v284 = vld [vmem:[%s7 + $0x2c] sm:$0xf]
    %v285 = vld [vmem:[%s7 + $0x30] sm:$0xf]
    %v286 = vld [vmem:[%s7 + $0x34] sm:$0xf]
    %v287 = vld [vmem:[%s7 + $0x38] sm:$0xf]
    %v288 = vld [vmem:[%s7 + $0x3c] sm:$0xf]
    %v289 = vld [vmem:[%s8] sm:$0x1]
    %v291 = vperm.slane %v289, 0
    %v309 = vunpack.c.l.b16 %v273
    %v310 = vunpack.c.l.b16 %v274
    %v311 = vunpack.c.l.b16 %v275
    %v312 = vunpack.c.l.b16 %v276
    %v313 = vunpack.c.l.b16 %v277
    %v314 = vunpack.c.l.b16 %v278
    %v315 = vunpack.c.l.b16 %v279
    %v316 = vunpack.c.l.b16 %v280
    %v317 = vunpack.c.l.b16 %v281
    %v318 = vunpack.c.l.b16 %v282
    %v319 = vunpack.c.l.b16 %v283
    %v320 = vunpack.c.l.b16 %v284
    %v321 = vunpack.c.l.b16 %v285
    %v322 = vunpack.c.l.b16 %v286
    %v323 = vunpack.c.l.b16 %v287
    %v324 = vunpack.c.l.b16 %v288
    %v325 = vpack.c.b16 %v310, %v309
    %v326 = vpack.c.b16 %v312, %v311
    %v327 = vpack.c.b16 %v314, %v313
    %v328 = vpack.c.b16 %v316, %v315
    %v329 = vpack.c.b16 %v318, %v317
    %v330 = vpack.c.b16 %v320, %v319
    %v331 = vpack.c.b16 %v322, %v321
    %v332 = vpack.c.b16 %v324, %v323
    %341 = vmatpush.bf16.msra.mxu0 %v332
    %342 = vmatpush.bf16.msra.mxu0 %v331
    %343 = vmatpush.bf16.msra.mxu0 %v330
    %344 = vmatpush.bf16.msra.mxu0 %v329
    %345 = vmatpush.bf16.msra.mxu0 %v328
    %346 = vmatpush.bf16.msra.mxu0 %v327
    %347 = vmatpush.bf16.msra.mxu0 %v326
    %348 = vmatpush.bf16.msra.mxu0 %v325
    %349 = vmatmul.bf16.gmra.mxu0 %v272
    %v350 = vpop.f32.mrf.mxu0
    %v351 = vadd.f32 %v291, %v350
    %v352 = vpop.f32.mrf.mxu0
    %353 = vdwg.mxu0
    %vm354 = vcmask 130048
    %355 = vst.msk [vmem:[#allocation7] sm:$0xff] %vm354, %v351
    // Predicated region
    $region46: #{tpu_custom_call.1} parent=1 // pred_check
      _
    $region47: #{tpu_custom_call.1} parent=1 // pred_check_branch
      %357 = sbr.rel (0) target = $region49
    $region48: #{tpu_custom_call.1} parent=1 // pred_region
      %359 = vsyncadd [#allocation4], 0
      %s361 = sshll.u32 [#allocation7], 4
      %s362 = int_to_ptr.vmem [resolvable:$true] %s361
      %s363 = sshll.u32 %s9, 4
      %s364 = int_to_ptr.hbm [resolvable:$true] %s363
      %366 = dma.vmem_to_hbm [thread:$0]  %s362, 128, %s364, [#allocation4]
    $region49: #{tpu_custom_call.1} parent=1 // pred_fallthru
      _
    // Predicated region
    $region50: #{tpu_custom_call.1} parent=1 // pred_check
      _
    $region51: #{tpu_custom_call.1} parent=1 // pred_check_branch
      %368 = sbr.rel (0) target = $region53
    $region52: #{tpu_custom_call.1} parent=1 // pred_region
      %370 = dma.done [#allocation4], 128
    $region53: #{tpu_custom_call.1} parent=1 // pred_fallthru
      _
    %371 = vsyncpa [#allocation3], 1
    %372 = vsyncpa [#allocation6], 1
    %373 = vsyncpa [#allocation4], 1

</llo_original>
